<compile_context>
chip_gen: v7x
topology: tpu7x:2x2x1
jax: 0.10.0
libtpu: 0.0.40
codegen_flags: <defaults>
</compile_context>

<pallas_src>
import jax
import jax.numpy as jnp
from jax.experimental import pallas as pl
from jax.experimental.pallas import tpu as pltpu

EPS = 1e-7            # torch.float32 eps used by the Hyperboloid manifold
MIN_NORM = 1e-15
MXU_DTYPE = jnp.bfloat16          # matmul operand dtype (accumulation stays f32)


def _round_up(x, m):
    return ((x + m - 1) // m) * m


def _divisor_tile(total, cap):
    """Largest multiple of 128 that divides `total` (a multiple of 128) and is <= cap."""
    cap = max(cap, 128)
    best = 128
    for d in range(1, total // 128 + 1):
        t = d * 128
        if total % t == 0 and t <= cap:
            best = t
    return best


def _pick_config(n, dp):
    """Per-generation tiles / VMEM limit; tiles always divide the padded row count."""
    try:
        kind = jax.devices()[0].device_kind.lower()
    except Exception:
        kind = ""
    if "v7" in kind:
        # 64 MiB VMEM/TC, 3.2 TB/s HBM, 2 TCs: big adj tiles, keep >=2 row tiles.
        tm_cap, adj_tile_bytes, vmem_limit, two_cores = 512, 4 << 20, 48 << 20, True
    elif "v6" in kind:
        tm_cap, adj_tile_bytes, vmem_limit, two_cores = 1024, 8 << 20, 64 << 20, False
    else:  # v5e and unknown: conservative
        tm_cap, adj_tile_bytes, vmem_limit, two_cores = 512, 2 << 20, 32 << 20, False

    np_ = _round_up(n, 128)                  # <= 127 padded rows (never lcm(tm, tk))
    tm = _divisor_tile(np_, tm_cap)
    if two_cores and np_ // tm < 2 and np_ >= 256:
        tm = _divisor_tile(np_, np_ // 2)    # both TensorCores get row tiles (megacore)
    tk_cap = max(128, adj_tile_bytes // (tm * 2))       # bf16 adj-tile byte budget
    tk = _divisor_tile(np_, tk_cap)

    # Keep the tangent operand resident in VMEM when it fits (double-buffered full-array
    # bf16 block + adj double buffer + out/acc), leaving headroom for Mosaic scratch.
    h_bytes = 2 * np_ * dp * 2
    adj_buf = 2 * tm * tk * 2
    out_buf = 2 * tm * dp * 4
    acc_buf = tm * dp * 4
    h_resident = (h_bytes + adj_buf + out_buf + acc_buf) <= vmem_limit - (8 << 20)
    return tm, tk, np_, vmem_limit, h_resident


def _logmap0(x_p, c, tm, vmem_limit):
    """x_p: (Np, Dp) f32 padded hyperboloid points -> (Np, Dp) bf16 tangent vectors."""
    np_, dp = x_p.shape
    sqrtK = (1.0 / c) ** 0.5

    def kernel(x_ref, xt_ref):
        x = x_ref[...]                                        # (tm, Dp) f32
        col = jax.lax.broadcasted_iota(jnp.int32, x.shape, 1)
        y = jnp.where(col == 0, 0.0, x)                       # spatial part (col 0 -> 0)
        sq = jnp.sum(y * y, axis=-1, keepdims=True)           # no x0^2 cancellation
        y_norm = jnp.maximum(jnp.sqrt(sq), MIN_NORM)
        theta = jnp.maximum(x[:, 0:1] / sqrtK, 1.0 + EPS)
        arcosh = jnp.log(theta + jnp.sqrt(theta * theta - 1.0))
        coeff = sqrtK * arcosh / y_norm                       # (tm, 1) exact divide
        xt_ref[...] = (coeff * y).astype(xt_ref.dtype)        # time coord exactly 0

    return pl.pallas_call(
        kernel,
        out_shape=jax.ShapeDtypeStruct((np_, dp), MXU_DTYPE),
        grid_spec=pltpu.PrefetchScalarGridSpec(
            num_scalar_prefetch=0,
            grid=(np_ // tm,),
            in_specs=[pl.BlockSpec((tm, dp), lambda i: (i, 0))],
            out_specs=pl.BlockSpec((tm, dp), lambda i: (i, 0)),
        ),
        compiler_params=pltpu.CompilerParams(
            dimension_semantics=("parallel",),
            vmem_limit_bytes=vmem_limit),
    )(x_p)


def _aggregate(adj_p, h_p, c, tm, tk, vmem_limit, *, final, h_resident):
    """One GCN hop adj_p @ h_p; if final, fuse the expmap0 + proj epilogue."""
    np_, dp = h_p.shape
    K = 1.0 / c
    sqrtK = K ** 0.5
    nk = np_ // tk
    out_dtype = jnp.float32 if final else MXU_DTYPE

    def _epilogue(u):
        # expmap0 followed by proj (proj recomputes the time coordinate, so the cosh
        # term of expmap0 is never materialized).
        col = jax.lax.broadcasted_iota(jnp.int32, u.shape, 1)
        u_sp = jnp.where(col == 0, 0.0, u)                    # spatial tangent part
        u_sq = jnp.sum(u_sp * u_sp, axis=-1, keepdims=True)
        u_norm = jnp.maximum(jnp.sqrt(u_sq), MIN_NORM)
        th = u_norm / sqrtK
        e = jnp.exp(th)
        sinh = 0.5 * (e - pl.reciprocal(e))                   # reuse exp(th)
        coeff = sqrtK * sinh / u_norm                         # (tm, 1) exact divide
        y_sqnorm = (coeff * coeff) * u_sq                     # == ||spatial[:, 1:]||^2
        time = jnp.sqrt(jnp.maximum(K + y_sqnorm, EPS))
        return jnp.where(col == 0, time, coeff * u_sp)

    def _h_tile(h_ref, k):
        if h_resident:
            start = pl.multiple_of(k * tk, 128)
            return h_ref[pl.ds(start, tk), :]
        return h_ref[...]

    if final:
        # Accumulate directly in the resident f32 output block (no scratch needed).
        def kernel(adj_ref, h_ref, out_ref):
            k = pl.program_id(1)

            @pl.when(k == 0)
            def _init():
                out_ref[...] = jnp.zeros_like(out_ref)

            out_ref[...] += jnp.dot(adj_ref[...], _h_tile(h_ref, k),
                                    preferred_element_type=jnp.float32)

            @pl.when(k == nk - 1)
            def _finish():
                out_ref[...] = _epilogue(out_ref[...])

        scratch = []
    else:
        def kernel(adj_ref, h_ref, out_ref, acc_ref):
            k = pl.program_id(1)

            @pl.when(k == 0)
            def _init():
                acc_ref[...] = jnp.zeros_like(acc_ref)

            acc_ref[...] += jnp.dot(adj_ref[...], _h_tile(h_ref, k),
                                    preferred_element_type=jnp.float32)

            @pl.when(k == nk - 1)
            def _finish():
                out_ref[...] = acc_ref[...].astype(out_ref.dtype)

        scratch = [pltpu.VMEM((tm, dp), jnp.float32)]

    if h_resident:
        # Full-array, grid-invariant block: DMA'd once, sliced per k-step in-kernel.
        h_spec = pl.BlockSpec((np_, dp), lambda i, k: (0, 0))
    else:
        h_spec = pl.BlockSpec((tk, dp), lambda i, k: (k, 0))

    return pl.pallas_call(
        kernel,
        out_shape=jax.ShapeDtypeStruct((np_, dp), out_dtype),
        grid_spec=pltpu.PrefetchScalarGridSpec(
            num_scalar_prefetch=0,
            grid=(np_ // tm, nk),                       # reduction axis last
            in_specs=[
                pl.BlockSpec((tm, tk), lambda i, k: (i, k)),   # adj tile (bf16)
                h_spec,                                        # tangent features (bf16)
            ],
            out_specs=pl.BlockSpec((tm, dp), lambda i, k: (i, 0)),
            scratch_shapes=scratch,
        ),
        compiler_params=pltpu.CompilerParams(
            dimension_semantics=("parallel", "arbitrary"),
            vmem_limit_bytes=vmem_limit),
    )(adj_p, h_p)


def hyperbolic_layer(inputs, c, num_layers=2, network="plainGCN"):
    """Pallas implementation of HyperbolicLayer.forward: returns (h, adj)."""
    x, adj = inputs
    if network != "plainGCN":
        # TODO(synk): resSumGCN / resAddGCN / denseGCN stacking variants not implemented.
        raise NotImplementedError("only network='plainGCN' is implemented")
    num_gcn_layers = num_layers - 1
    if num_gcn_layers < 1:
        raise NotImplementedError("num_layers must be >= 2")

    n, d = x.shape
    assert adj.shape == (n, n)

    dp = _round_up(d, 128)                      # lane-dense D
    tm, tk, np_, vmem_limit, h_resident = _pick_config(n, dp)

    x_p = x.astype(jnp.float32)
    if (np_, dp) != (n, d):
        x_p = jnp.pad(x_p, ((0, np_ - n), (0, dp - d)))

    # adj is fed to the MXU in bf16; the dot accumulates in f32.
    # TODO(synk): cache the padded bf16 adjacency across calls (it is layer-invariant);
    # it is rebuilt per call here, which roughly doubles adj HBM traffic for one hop.
    adj_p = adj.astype(MXU_DTYPE)
    if np_ != n:
        adj_p = jnp.pad(adj_p, ((0, np_ - n), (0, np_ - n)))

    h = _logmap0(x_p, c, tm, vmem_limit)                      # (Np, Dp) bf16, time == 0
    for _ in range(num_gcn_layers - 1):
        h = _aggregate(adj_p, h, c, tm, tk, vmem_limit,
                       final=False, h_resident=h_resident)
    out = _aggregate(adj_p, h, c, tm, tk, vmem_limit,         # f32, expmap0 + proj fused
                     final=True, h_resident=h_resident)

    return out[:n, :d], adj


def _reference(x, adj, c, num_layers):
    """Pure-JAX f32 reference of the same forward pass (Hyperboloid manifold)."""
    K = 1.0 / c
    sqrtK = K ** 0.5
    x0 = x[:, :1]
    y = x[:, 1:]
    y_norm = jnp.maximum(jnp.linalg.norm(y, axis=-1, keepdims=True), MIN_NORM)
    theta = jnp.maximum(x0 / sqrtK, 1.0 + EPS)
    xt = jnp.concatenate(
        [jnp.zeros_like(x0), sqrtK * jnp.arccosh(theta) * y / y_norm], axis=-1)
    h = xt
    for _ in range(num_layers - 1):
        h = adj @ h
    u_sp = h[:, 1:]
    u_norm = jnp.maximum(jnp.linalg.norm(u_sp, axis=-1, keepdims=True), MIN_NORM)
    sp = sqrtK * jnp.sinh(u_norm / sqrtK) * u_sp / u_norm
    time = jnp.sqrt(jnp.maximum(K + jnp.sum(sp * sp, axis=-1, keepdims=True), EPS))
    return jnp.concatenate([time, sp], axis=-1)


if __name__ == "__main__":
    # Small deterministic example: N=8 nodes, D=32 Lorentz coordinates, c=1.0
    N, D = 8, 32
    c = 1.0
    K = 1.0 / c

    key = jax.random.PRNGKey(0)
    k_sp, k_adj = jax.random.split(key)

    # Valid hyperboloid points: random spatial part, time = sqrt(K + ||spatial||^2)
    spatial = 0.1 * jax.random.normal(k_sp, (N, D - 1), dtype=jnp.float32)
    time = jnp.sqrt(K + jnp.sum(spatial * spatial, axis=-1, keepdims=True))
    x = jnp.concatenate([time, spatial], axis=-1)             # (N, D)

    # Row-normalized dense adjacency (stand-in for the sparse matrix in torch.spmm)
    a = jax.random.uniform(k_adj, (N, N), dtype=jnp.float32)
    adj = a / jnp.sum(a, axis=-1, keepdims=True)

    h, adj_out = hyperbolic_layer((x, adj), c=c, num_layers=2, network="plainGCN")
    jax.block_until_ready(h)
    assert h.shape == (N, D) and h.dtype == jnp.float32
    assert bool(jnp.all(jnp.isfinite(h)))
    ref2 = _reference(x, adj, c, num_layers=2)
    assert bool(jnp.allclose(h, ref2, rtol=5e-2, atol=5e-2)), \
        float(jnp.max(jnp.abs(h - ref2)))

    # Also exercise a multi-hop stack (num_layers=3 -> two aggregation hops).
    h3, _ = hyperbolic_layer((x, adj), c=c, num_layers=3, network="plainGCN")
    jax.block_until_ready(h3)
    assert h3.shape == (N, D)
    assert bool(jnp.all(jnp.isfinite(h3)))
    ref3 = _reference(x, adj, c, num_layers=3)
    assert bool(jnp.allclose(h3, ref3, rtol=5e-2, atol=5e-2)), \
        float(jnp.max(jnp.abs(h3 - ref3)))

    print("KERNEL_OK")
</pallas_src>

<mosaic_0001>
module attributes {stable_mosaic.version = 11 : i64} {
  func.func @kernel(%arg0: i32, %arg1: memref<128x128xf32, #tpu.memory_space<vmem>>, %arg2: memref<128x128xbf16, #tpu.memory_space<vmem>>) attributes {dimension_semantics = [#tpu.dimension_semantics<parallel>], iteration_bounds = array<i64: 1>, scalar_prefetch = 0 : i64, scratch_operands = 0 : i64, tpu.core_type = #tpu.core_type<tc>, window_params = [{transform_indices = @transform_0, window_bounds = array<i64: 128, 128>}, {transform_indices = @transform_1, window_bounds = array<i64: 128, 128>}]} {
    %c0 = arith.constant 0 : index
    %c0_0 = arith.constant 0 : index
    %0 = vector.load %arg1[%c0, %c0_0] : memref<128x128xf32, #tpu.memory_space<vmem>>, vector<128x128xf32>
    %1 = tpu.iota {dimensions = array<i32: 1>} : vector<128x128xi32>
    %c0_i32 = arith.constant 0 : i32
    %2 = vector.broadcast %c0_i32 : i32 to vector<128x128xi32>
    %3 = arith.cmpi eq, %1, %2 : vector<128x128xi32>
    %cst = arith.constant 0.000000e+00 : f32
    %4 = vector.broadcast %cst : f32 to vector<128x128xf32>
    %5 = arith.select %3, %4, %0 : vector<128x128xi1>, vector<128x128xf32>
    %6 = arith.mulf %5, %5 : vector<128x128xf32>
    %cst_1 = arith.constant dense<0.000000e+00> : vector<128xf32>
    %7 = vector.multi_reduction <add>, %6, %cst_1 [1] : vector<128x128xf32> to vector<128xf32>
    %8 = vector.shape_cast %7 : vector<128xf32> to vector<128x1xf32>
    %9 = math.sqrt %8 : vector<128x1xf32>
    %cst_2 = arith.constant 1.000000e-15 : f32
    %10 = vector.broadcast %cst_2 : f32 to vector<128x1xf32>
    %11 = arith.maximumf %9, %10 : vector<128x1xf32>
    %12 = vector.extract_strided_slice %0 {offsets = [0, 0], sizes = [128, 1], strides = [1, 1]} : vector<128x128xf32> to vector<128x1xf32>
    %cst_3 = arith.constant 1.000000e+00 : f32
    %13 = vector.broadcast %cst_3 : f32 to vector<128x1xf32>
    %14 = arith.divf %12, %13 : vector<128x1xf32>
    %cst_4 = arith.constant 1.00000012 : f32
    %15 = vector.broadcast %cst_4 : f32 to vector<128x1xf32>
    %16 = arith.maximumf %14, %15 : vector<128x1xf32>
    %17 = arith.mulf %16, %16 : vector<128x1xf32>
    %cst_5 = arith.constant 1.000000e+00 : f32
    %18 = vector.broadcast %cst_5 : f32 to vector<128x1xf32>
    %19 = arith.subf %17, %18 : vector<128x1xf32>
    %20 = math.sqrt %19 : vector<128x1xf32>
    %21 = arith.addf %16, %20 : vector<128x1xf32>
    %22 = math.log %21 : vector<128x1xf32>
    %cst_6 = arith.constant 1.000000e+00 : f32
    %23 = vector.broadcast %cst_6 : f32 to vector<128x1xf32>
    %24 = arith.mulf %23, %22 : vector<128x1xf32>
    %25 = arith.divf %24, %11 : vector<128x1xf32>
    %26 = vector.broadcast %25 : vector<128x1xf32> to vector<128x128xf32>
    %27 = arith.mulf %26, %5 : vector<128x128xf32>
    %28 = arith.truncf %27 : vector<128x128xf32> to vector<128x128xbf16>
    %c0_7 = arith.constant 0 : index
    %c0_8 = arith.constant 0 : index
    %29 = vector.load %arg2[%c0_7, %c0_8] : memref<128x128xbf16, #tpu.memory_space<vmem>>, vector<128x128xbf16>
    tpu.vector_store %arg2[%c0_7, %c0_8], %28 {strides = array<i32>} : memref<128x128xbf16, #tpu.memory_space<vmem>>, vector<128x128xbf16>,
    return
  }
  func.func @transform_0(%arg0: i32) -> (i32, i32) {
    %c0_i32 = arith.constant 0 : i32
    %c0_i32_0 = arith.constant 0 : i32
    return %arg0, %c0_i32 : i32, i32
  }
  func.func @transform_1(%arg0: i32) -> (i32, i32) {
    %c0_i32 = arith.constant 0 : i32
    %c0_i32_0 = arith.constant 0 : i32
    return %arg0, %c0_i32 : i32, i32
  }
}

</mosaic_0001>

<llo_original>
// kernel: tpu_custom_call.1
$region0: #{tpu_custom_call.1}
  #allocation0 [shape = 'u32[]', space=smem, size = 0x4, offset = 0x4, fixed_abs, tag = 'smem constant byte address 0x4 - core index']
  #allocation1 [shape = 'u32[144,128]{1,0:T(1,128)}', space=vmem, size = 0x12000, scoped, tag = 'internal scratch']
  %s0 = inlined_call_operand.hbm [shape: f32[128,128], index: 0, kind: input, shape index: {}]
  %s1 = inlined_call_operand.hbm [shape: bf16[128,128], index: 1, kind: output, shape index: {}]
  %s2 = sld [smem:[#allocation0]]
  $region18: #{tpu_custom_call.1} parent=0
    _
  %s4 = ssub.s32 1, %s2
  %s5 = scalar_select 0, %s4, %s2
  $region1: #{tpu_custom_call.1} parent=0
    #allocation2 [shape = 'u8[65536]{0}', space=vmem, size = 0x10000, scoped, tag = 'input window, operand 0, single buffered']
    #allocation3 [shape = 's32[1]{0}', space=sflag, size = 0x4, scoped, tag = 'scoped memory for tpu_custom_call.1']
    #allocation4 [shape = 's32[1]{0}', space=sflag, size = 0x4, scoped, tag = 'scoped memory for tpu_custom_call.1']
    #allocation5 [shape = 'u8[32768]{0}', space=vmem, size = 0x8000, scoped, tag = 'output window, operand 0, single buffered']
    %6 = vsyncpa [#allocation3], 0
    %7 = vsyncpa [#allocation4], 0
    // Predicated region
    $region2: #{tpu_custom_call.1} parent=1 // pred_check
      _
    $region3: #{tpu_custom_call.1} parent=1 // pred_check_branch
      %9 = sbr.rel (0) target = $region5
    $region4: #{tpu_custom_call.1} parent=1 // pred_region
      %s11 = ssub.s32 2048, 2048
      %12 = vsyncadd [#allocation3], %s11
      %s13 = sshll.u32 [#allocation2], 4
      %s14 = int_to_ptr.vmem [resolvable:$true] %s13
      %19 = dma.hbm_to_vmem [thread:$0]  %s0, 2048, %s14, [#allocation3], 128, 128, 8
    $region5: #{tpu_custom_call.1} parent=1 // pred_fallthru
      _
    // Predicated region
    $region6: #{tpu_custom_call.1} parent=1 // pred_check
      _
    $region7: #{tpu_custom_call.1} parent=1 // pred_check_branch
      %21 = sbr.rel (0) target = $region9
    $region8: #{tpu_custom_call.1} parent=1 // pred_region
      %22 = dma.done [#allocation3], 2048
    $region9: #{tpu_custom_call.1} parent=1 // pred_fallthru
      _
    %v23 = vld [vmem:[#allocation2] sm:$0xff]
    %v24 = vld [vmem:[#allocation2 + $0x8] sm:$0xff]
    %v25 = vld [vmem:[#allocation2 + $0x10] sm:$0xff]
    %v26 = vld [vmem:[#allocation2 + $0x18] sm:$0xff]
    %v27 = vld [vmem:[#allocation2 + $0x20] sm:$0xff]
    %v28 = vld [vmem:[#allocation2 + $0x28] sm:$0xff]
    %v29 = vld [vmem:[#allocation2 + $0x30] sm:$0xff]
    %v30 = vld [vmem:[#allocation2 + $0x38] sm:$0xff]
    %v31 = vld [vmem:[#allocation2 + $0x40] sm:$0xff]
    %v32 = vld [vmem:[#allocation2 + $0x48] sm:$0xff]
    %v33 = vld [vmem:[#allocation2 + $0x50] sm:$0xff]
    %v34 = vld [vmem:[#allocation2 + $0x58] sm:$0xff]
    %v35 = vld [vmem:[#allocation2 + $0x60] sm:$0xff]
    %v36 = vld [vmem:[#allocation2 + $0x68] sm:$0xff]
    %v37 = vld [vmem:[#allocation2 + $0x70] sm:$0xff]
    %v38 = vld [vmem:[#allocation2 + $0x78] sm:$0xff]
    %v39 = vlaneseq
    %v40 = vand.u32 %v39, 127
    %vm41 = vcmp.eq.s32.totalorder %v40, 0
    %v42 = vsel %vm41, 0.0, %v23
    %v43 = vsel %vm41, 0.0, %v24
    %v44 = vsel %vm41, 0.0, %v25
    %v45 = vsel %vm41, 0.0, %v26
    %v46 = vsel %vm41, 0.0, %v27
    %v47 = vsel %vm41, 0.0, %v28
    %v48 = vsel %vm41, 0.0, %v29
    %v49 = vsel %vm41, 0.0, %v30
    %v50 = vsel %vm41, 0.0, %v31
    %v51 = vsel %vm41, 0.0, %v32
    %v52 = vsel %vm41, 0.0, %v33
    %v53 = vsel %vm41, 0.0, %v34
    %v54 = vsel %vm41, 0.0, %v35
    %v55 = vsel %vm41, 0.0, %v36
    %v56 = vsel %vm41, 0.0, %v37
    %v57 = vsel %vm41, 0.0, %v38
    %v58 = vmul.f32 %v42, %v42
    %v59 = vmul.f32 %v43, %v43
    %v60 = vmul.f32 %v44, %v44
    %v61 = vmul.f32 %v45, %v45
    %v62 = vmul.f32 %v46, %v46
    %v63 = vmul.f32 %v47, %v47
    %v64 = vmul.f32 %v48, %v48
    %v65 = vmul.f32 %v49, %v49
    %v66 = vmul.f32 %v50, %v50
    %v67 = vmul.f32 %v51, %v51
    %v68 = vmul.f32 %v52, %v52
    %v69 = vmul.f32 %v53, %v53
    %v70 = vmul.f32 %v54, %v54
    %v71 = vmul.f32 %v55, %v55
    %v72 = vmul.f32 %v56, %v56
    %v73 = vmul.f32 %v57, %v57
    %74 = vadd.xlane.f32.xlu0 %v58
    %v75 = vpop.xlane.xlu0 %74
    %76 = vadd.xlane.f32.xlu0 %v59
    %v77 = vpop.xlane.xlu0 %76
    %78 = vadd.xlane.f32.xlu0 %v60
    %v79 = vpop.xlane.xlu0 %78
    %80 = vadd.xlane.f32.xlu0 %v61
    %v81 = vpop.xlane.xlu0 %80
    %82 = vadd.xlane.f32.xlu0 %v62
    %v83 = vpop.xlane.xlu0 %82
    %84 = vadd.xlane.f32.xlu0 %v63
    %v85 = vpop.xlane.xlu0 %84
    %86 = vadd.xlane.f32.xlu0 %v64
    %v87 = vpop.xlane.xlu0 %86
    %88 = vadd.xlane.f32.xlu0 %v65
    %v89 = vpop.xlane.xlu0 %88
    %90 = vadd.xlane.f32.xlu0 %v66
    %v91 = vpop.xlane.xlu0 %90
    %92 = vadd.xlane.f32.xlu0 %v67
    %v93 = vpop.xlane.xlu0 %92
    %94 = vadd.xlane.f32.xlu0 %v68
    %v95 = vpop.xlane.xlu0 %94
    %96 = vadd.xlane.f32.xlu0 %v69
    %v97 = vpop.xlane.xlu0 %96
    %98 = vadd.xlane.f32.xlu0 %v70
    %v99 = vpop.xlane.xlu0 %98
    %100 = vadd.xlane.f32.xlu0 %v71
    %v101 = vpop.xlane.xlu0 %100
    %102 = vadd.xlane.f32.xlu0 %v72
    %v103 = vpop.xlane.xlu0 %102
    %104 = vadd.xlane.f32.xlu0 %v73
    %v105 = vpop.xlane.xlu0 %104
    %v106 = vrsqrt.pop %v75
    %v107 = vmul.f32 %v75, %v106
    %vm108 = vcmp.eq.f32.partialorder %v75, inf
    %v109 = vsel %vm108, %v75, %v107
    %vm110 = vcmp.eq.f32.partialorder %v75, 0.0
    %v111 = vand.u32 %v75, 2147483648
    %v112 = vsel %vm110, %v111, %v109
    %v113 = vrsqrt.pop %v77
    %v114 = vmul.f32 %v77, %v113
    %vm115 = vcmp.eq.f32.partialorder %v77, inf
    %v116 = vsel %vm115, %v77, %v114
    %vm117 = vcmp.eq.f32.partialorder %v77, 0.0
    %v118 = vand.u32 %v77, 2147483648
    %v119 = vsel %vm117, %v118, %v116
    %v120 = vrsqrt.pop %v79
    %v121 = vmul.f32 %v79, %v120
    %vm122 = vcmp.eq.f32.partialorder %v79, inf
    %v123 = vsel %vm122, %v79, %v121
    %vm124 = vcmp.eq.f32.partialorder %v79, 0.0
    %v125 = vand.u32 %v79, 2147483648
    %v126 = vsel %vm124, %v125, %v123
    %v127 = vrsqrt.pop %v81
    %v128 = vmul.f32 %v81, %v127
    %vm129 = vcmp.eq.f32.partialorder %v81, inf
    %v130 = vsel %vm129, %v81, %v128
    %vm131 = vcmp.eq.f32.partialorder %v81, 0.0
    %v132 = vand.u32 %v81, 2147483648
    %v133 = vsel %vm131, %v132, %v130
    %v134 = vrsqrt.pop %v83
    %v135 = vmul.f32 %v83, %v134
    %vm136 = vcmp.eq.f32.partialorder %v83, inf
    %v137 = vsel %vm136, %v83, %v135
    %vm138 = vcmp.eq.f32.partialorder %v83, 0.0
    %v139 = vand.u32 %v83, 2147483648
    %v140 = vsel %vm138, %v139, %v137
    %v141 = vrsqrt.pop %v85
    %v142 = vmul.f32 %v85, %v141
    %vm143 = vcmp.eq.f32.partialorder %v85, inf
    %v144 = vsel %vm143, %v85, %v142
    %vm145 = vcmp.eq.f32.partialorder %v85, 0.0
    %v146 = vand.u32 %v85, 2147483648
    %v147 = vsel %vm145, %v146, %v144
    %v148 = vrsqrt.pop %v87
    %v149 = vmul.f32 %v87, %v148
    %vm150 = vcmp.eq.f32.partialorder %v87, inf
    %v151 = vsel %vm150, %v87, %v149
    %vm152 = vcmp.eq.f32.partialorder %v87, 0.0
    %v153 = vand.u32 %v87, 2147483648
    %v154 = vsel %vm152, %v153, %v151
    %v155 = vrsqrt.pop %v89
    %v156 = vmul.f32 %v89, %v155
    %vm157 = vcmp.eq.f32.partialorder %v89, inf
    %v158 = vsel %vm157, %v89, %v156
    %vm159 = vcmp.eq.f32.partialorder %v89, 0.0
    %v160 = vand.u32 %v89, 2147483648
    %v161 = vsel %vm159, %v160, %v158
    %v162 = vrsqrt.pop %v91
    %v163 = vmul.f32 %v91, %v162
    %vm164 = vcmp.eq.f32.partialorder %v91, inf
    %v165 = vsel %vm164, %v91, %v163
    %vm166 = vcmp.eq.f32.partialorder %v91, 0.0
    %v167 = vand.u32 %v91, 2147483648
    %v168 = vsel %vm166, %v167, %v165
    %v169 = vrsqrt.pop %v93
    %v170 = vmul.f32 %v93, %v169
    %vm171 = vcmp.eq.f32.partialorder %v93, inf
    %v172 = vsel %vm171, %v93, %v170
    %vm173 = vcmp.eq.f32.partialorder %v93, 0.0
    %v174 = vand.u32 %v93, 2147483648
    %v175 = vsel %vm173, %v174, %v172
    %v176 = vrsqrt.pop %v95
    %v177 = vmul.f32 %v95, %v176
    %vm178 = vcmp.eq.f32.partialorder %v95, inf
    %v179 = vsel %vm178, %v95, %v177
    %vm180 = vcmp.eq.f32.partialorder %v95, 0.0
    %v181 = vand.u32 %v95, 2147483648
    %v182 = vsel %vm180, %v181, %v179
    %v183 = vrsqrt.pop %v97
    %v184 = vmul.f32 %v97, %v183
    %vm185 = vcmp.eq.f32.partialorder %v97, inf
    %v186 = vsel %vm185, %v97, %v184
    %vm187 = vcmp.eq.f32.partialorder %v97, 0.0
    %v188 = vand.u32 %v97, 2147483648
    %v189 = vsel %vm187, %v188, %v186
    %v190 = vrsqrt.pop %v99
    %v191 = vmul.f32 %v99, %v190
    %vm192 = vcmp.eq.f32.partialorder %v99, inf
    %v193 = vsel %vm192, %v99, %v191
    %vm194 = vcmp.eq.f32.partialorder %v99, 0.0
    %v195 = vand.u32 %v99, 2147483648
    %v196 = vsel %vm194, %v195, %v193
    %v197 = vrsqrt.pop %v101
    %v198 = vmul.f32 %v101, %v197
    %vm199 = vcmp.eq.f32.partialorder %v101, inf
    %v200 = vsel %vm199, %v101, %v198
    %vm201 = vcmp.eq.f32.partialorder %v101, 0.0
    %v202 = vand.u32 %v101, 2147483648
    %v203 = vsel %vm201, %v202, %v200
    %v204 = vrsqrt.pop %v103
    %v205 = vmul.f32 %v103, %v204
    %vm206 = vcmp.eq.f32.partialorder %v103, inf
    %v207 = vsel %vm206, %v103, %v205
    %vm208 = vcmp.eq.f32.partialorder %v103, 0.0
    %v209 = vand.u32 %v103, 2147483648
    %v210 = vsel %vm208, %v209, %v207
    %v211 = vrsqrt.pop %v105
    %v212 = vmul.f32 %v105, %v211
    %vm213 = vcmp.eq.f32.partialorder %v105, inf
    %v214 = vsel %vm213, %v105, %v212
    %vm215 = vcmp.eq.f32.partialorder %v105, 0.0
    %v216 = vand.u32 %v105, 2147483648
    %v217 = vsel %vm215, %v216, %v214
    %v218 = vmax.f32 %v112, 1e-15
    %v219 = vmax.f32 %v119, 1e-15
    %v220 = vmax.f32 %v126, 1e-15
    %v221 = vmax.f32 %v133, 1e-15
    %v222 = vmax.f32 %v140, 1e-15
    %v223 = vmax.f32 %v147, 1e-15
    %v224 = vmax.f32 %v154, 1e-15
    %v225 = vmax.f32 %v161, 1e-15
    %v226 = vmax.f32 %v168, 1e-15
    %v227 = vmax.f32 %v175, 1e-15
    %v228 = vmax.f32 %v182, 1e-15
    %v229 = vmax.f32 %v189, 1e-15
    %v230 = vmax.f32 %v196, 1e-15
    %v231 = vmax.f32 %v203, 1e-15
    %v232 = vmax.f32 %v210, 1e-15
    %v233 = vmax.f32 %v217, 1e-15
    %v234 = vmax.f32 %v23, 1.0000001
    %v235 = vmax.f32 %v24, 1.0000001
    %v236 = vmax.f32 %v25, 1.0000001
    %v237 = vmax.f32 %v26, 1.0000001
    %v238 = vmax.f32 %v27, 1.0000001
    %v239 = vmax.f32 %v28, 1.0000001
    %v240 = vmax.f32 %v29, 1.0000001
    %v241 = vmax.f32 %v30, 1.0000001
    %v242 = vmax.f32 %v31, 1.0000001
    %v243 = vmax.f32 %v32, 1.0000001
    %v244 = vmax.f32 %v33, 1.0000001
    %v245 = vmax.f32 %v34, 1.0000001
    %v246 = vmax.f32 %v35, 1.0000001
    %v247 = vmax.f32 %v36, 1.0000001
    %v248 = vmax.f32 %v37, 1.0000001
    %v249 = vmax.f32 %v38, 1.0000001
    %v250 = vmul.f32 %v234, %v234
    %v251 = vmul.f32 %v235, %v235
    %v252 = vmul.f32 %v236, %v236
    %v253 = vmul.f32 %v237, %v237
    %v254 = vmul.f32 %v238, %v238
    %v255 = vmul.f32 %v239, %v239
    %v256 = vmul.f32 %v240, %v240
    %v257 = vmul.f32 %v241, %v241
    %v258 = vmul.f32 %v242, %v242
    %v259 = vmul.f32 %v243, %v243
    %v260 = vmul.f32 %v244, %v244
    %v261 = vmul.f32 %v245, %v245
    %v262 = vmul.f32 %v246, %v246
    %v263 = vmul.f32 %v247, %v247
    %v264 = vmul.f32 %v248, %v248
    %v265 = vmul.f32 %v249, %v249
    %v266 = vsub.f32 %v250, 1.0
    %v267 = vsub.f32 %v251, 1.0
    %v268 = vsub.f32 %v252, 1.0
    %v269 = vsub.f32 %v253, 1.0
    %v270 = vsub.f32 %v254, 1.0
    %v271 = vsub.f32 %v255, 1.0
    %v272 = vsub.f32 %v256, 1.0
    %v273 = vsub.f32 %v257, 1.0
    %v274 = vsub.f32 %v258, 1.0
    %v275 = vsub.f32 %v259, 1.0
    %v276 = vsub.f32 %v260, 1.0
    %v277 = vsub.f32 %v261, 1.0
    %v278 = vsub.f32 %v262, 1.0
    %v279 = vsub.f32 %v263, 1.0
    %v280 = vsub.f32 %v264, 1.0
    %v281 = vsub.f32 %v265, 1.0
    %v282 = vrsqrt.pop %v266
    %v283 = vmul.f32 %v266, %v282
    %vm284 = vcmp.eq.f32.partialorder %v266, inf
    %v285 = vsel %vm284, %v266, %v283
    %vm286 = vcmp.eq.f32.partialorder %v266, 0.0
    %v287 = vand.u32 %v266, 2147483648
    %v288 = vsel %vm286, %v287, %v285
    %v289 = vrsqrt.pop %v267
    %v290 = vmul.f32 %v267, %v289
    %vm291 = vcmp.eq.f32.partialorder %v267, inf
    %v292 = vsel %vm291, %v267, %v290
    %vm293 = vcmp.eq.f32.partialorder %v267, 0.0
    %v294 = vand.u32 %v267, 2147483648
    %v295 = vsel %vm293, %v294, %v292
    %v296 = vrsqrt.pop %v268
    %v297 = vmul.f32 %v268, %v296
    %vm298 = vcmp.eq.f32.partialorder %v268, inf
    %v299 = vsel %vm298, %v268, %v297
    %vm300 = vcmp.eq.f32.partialorder %v268, 0.0
    %v301 = vand.u32 %v268, 2147483648
    %v302 = vsel %vm300, %v301, %v299
    %v303 = vrsqrt.pop %v269
    %v304 = vmul.f32 %v269, %v303
    %vm305 = vcmp.eq.f32.partialorder %v269, inf
    %v306 = vsel %vm305, %v269, %v304
    %vm307 = vcmp.eq.f32.partialorder %v269, 0.0
    %v308 = vand.u32 %v269, 2147483648
    %v309 = vsel %vm307, %v308, %v306
    %v310 = vrsqrt.pop %v270
    %v311 = vmul.f32 %v270, %v310
    %vm312 = vcmp.eq.f32.partialorder %v270, inf
    %v313 = vsel %vm312, %v270, %v311
    %vm314 = vcmp.eq.f32.partialorder %v270, 0.0
    %v315 = vand.u32 %v270, 2147483648
    %v316 = vsel %vm314, %v315, %v313
    %v317 = vrsqrt.pop %v271
    %v318 = vmul.f32 %v271, %v317
    %vm319 = vcmp.eq.f32.partialorder %v271, inf
    %v320 = vsel %vm319, %v271, %v318
    %vm321 = vcmp.eq.f32.partialorder %v271, 0.0
    %v322 = vand.u32 %v271, 2147483648
    %v323 = vsel %vm321, %v322, %v320
    %v324 = vrsqrt.pop %v272
    %v325 = vmul.f32 %v272, %v324
    %vm326 = vcmp.eq.f32.partialorder %v272, inf
    %v327 = vsel %vm326, %v272, %v325
    %vm328 = vcmp.eq.f32.partialorder %v272, 0.0
    %v329 = vand.u32 %v272, 2147483648
    %v330 = vsel %vm328, %v329, %v327
    %v331 = vrsqrt.pop %v273
    %v332 = vmul.f32 %v273, %v331
    %vm333 = vcmp.eq.f32.partialorder %v273, inf
    %v334 = vsel %vm333, %v273, %v332
    %vm335 = vcmp.eq.f32.partialorder %v273, 0.0
    %v336 = vand.u32 %v273, 2147483648
    %v337 = vsel %vm335, %v336, %v334
    %v338 = vrsqrt.pop %v274
    %v339 = vmul.f32 %v274, %v338
    %vm340 = vcmp.eq.f32.partialorder %v274, inf
    %v341 = vsel %vm340, %v274, %v339
    %vm342 = vcmp.eq.f32.partialorder %v274, 0.0
    %v343 = vand.u32 %v274, 2147483648
    %v344 = vsel %vm342, %v343, %v341
    %v345 = vrsqrt.pop %v275
    %v346 = vmul.f32 %v275, %v345
    %vm347 = vcmp.eq.f32.partialorder %v275, inf
    %v348 = vsel %vm347, %v275, %v346
    %vm349 = vcmp.eq.f32.partialorder %v275, 0.0
    %v350 = vand.u32 %v275, 2147483648
    %v351 = vsel %vm349, %v350, %v348
    %v352 = vrsqrt.pop %v276
    %v353 = vmul.f32 %v276, %v352
    %vm354 = vcmp.eq.f32.partialorder %v276, inf
    %v355 = vsel %vm354, %v276, %v353
    %vm356 = vcmp.eq.f32.partialorder %v276, 0.0
    %v357 = vand.u32 %v276, 2147483648
    %v358 = vsel %vm356, %v357, %v355
    %v359 = vrsqrt.pop %v277
    %v360 = vmul.f32 %v277, %v359
    %vm361 = vcmp.eq.f32.partialorder %v277, inf
    %v362 = vsel %vm361, %v277, %v360
    %vm363 = vcmp.eq.f32.partialorder %v277, 0.0
    %v364 = vand.u32 %v277, 2147483648
    %v365 = vsel %vm363, %v364, %v362
    %v366 = vrsqrt.pop %v278
    %v367 = vmul.f32 %v278, %v366
    %vm368 = vcmp.eq.f32.partialorder %v278, inf
    %v369 = vsel %vm368, %v278, %v367
    %vm370 = vcmp.eq.f32.partialorder %v278, 0.0
    %v371 = vand.u32 %v278, 2147483648
    %v372 = vsel %vm370, %v371, %v369
    %v373 = vrsqrt.pop %v279
    %v374 = vmul.f32 %v279, %v373
    %vm375 = vcmp.eq.f32.partialorder %v279, inf
    %v376 = vsel %vm375, %v279, %v374
    %vm377 = vcmp.eq.f32.partialorder %v279, 0.0
    %v378 = vand.u32 %v279, 2147483648
    %v379 = vsel %vm377, %v378, %v376
    %v380 = vrsqrt.pop %v280
    %v381 = vmul.f32 %v280, %v380
    %vm382 = vcmp.eq.f32.partialorder %v280, inf
    %v383 = vsel %vm382, %v280, %v381
    %vm384 = vcmp.eq.f32.partialorder %v280, 0.0
    %v385 = vand.u32 %v280, 2147483648
    %v386 = vsel %vm384, %v385, %v383
    %v387 = vrsqrt.pop %v281
    %v388 = vmul.f32 %v281, %v387
    %vm389 = vcmp.eq.f32.partialorder %v281, inf
    %v390 = vsel %vm389, %v281, %v388
    %vm391 = vcmp.eq.f32.partialorder %v281, 0.0
    %v392 = vand.u32 %v281, 2147483648
    %v393 = vsel %vm391, %v392, %v390
    %v394 = vadd.f32 %v234, %v288
    %v395 = vadd.f32 %v235, %v295
    %v396 = vadd.f32 %v236, %v302
    %v397 = vadd.f32 %v237, %v309
    %v398 = vadd.f32 %v238, %v316
    %v399 = vadd.f32 %v239, %v323
    %v400 = vadd.f32 %v240, %v330
    %v401 = vadd.f32 %v241, %v337
    %v402 = vadd.f32 %v242, %v344
    %v403 = vadd.f32 %v243, %v351
    %v404 = vadd.f32 %v244, %v358
    %v405 = vadd.f32 %v245, %v365
    %v406 = vadd.f32 %v246, %v372
    %v407 = vadd.f32 %v247, %v379
    %v408 = vadd.f32 %v248, %v386
    %v409 = vadd.f32 %v249, %v393
    %v410 = vlog2.pop %v394
    %v411 = vmul.f32 %v410, 0.6931472
    %v412 = vlog2.pop %v395
    %v413 = vmul.f32 %v412, 0.6931472
    %v414 = vlog2.pop %v396
    %v415 = vmul.f32 %v414, 0.6931472
    %v416 = vlog2.pop %v397
    %v417 = vmul.f32 %v416, 0.6931472
    %v418 = vlog2.pop %v398
    %v419 = vmul.f32 %v418, 0.6931472
    %v420 = vlog2.pop %v399
    %v421 = vmul.f32 %v420, 0.6931472
    %v422 = vlog2.pop %v400
    %v423 = vmul.f32 %v422, 0.6931472
    %v424 = vlog2.pop %v401
    %v425 = vmul.f32 %v424, 0.6931472
    %v426 = vlog2.pop %v402
    %v427 = vmul.f32 %v426, 0.6931472
    %v428 = vlog2.pop %v403
    %v429 = vmul.f32 %v428, 0.6931472
    %v430 = vlog2.pop %v404
    %v431 = vmul.f32 %v430, 0.6931472
    %v432 = vlog2.pop %v405
    %v433 = vmul.f32 %v432, 0.6931472
    %v434 = vlog2.pop %v406
    %v435 = vmul.f32 %v434, 0.6931472
    %v436 = vlog2.pop %v407
    %v437 = vmul.f32 %v436, 0.6931472
    %v438 = vlog2.pop %v408
    %v439 = vmul.f32 %v438, 0.6931472
    %v440 = vlog2.pop %v409
    %v441 = vmul.f32 %v440, 0.6931472
    %v442 = vrcp.pop %v218
    %v443 = vmul.f32 %v411, %v442
    %v444 = vrcp.pop %v219
    %v445 = vmul.f32 %v413, %v444
    %v446 = vrcp.pop %v220
    %v447 = vmul.f32 %v415, %v446
    %v448 = vrcp.pop %v221
    %v449 = vmul.f32 %v417, %v448
    %v450 = vrcp.pop %v222
    %v451 = vmul.f32 %v419, %v450
    %v452 = vrcp.pop %v223
    %v453 = vmul.f32 %v421, %v452
    %v454 = vrcp.pop %v224
    %v455 = vmul.f32 %v423, %v454
    %v456 = vrcp.pop %v225
    %v457 = vmul.f32 %v425, %v456
    %v458 = vrcp.pop %v226
    %v459 = vmul.f32 %v427, %v458
    %v460 = vrcp.pop %v227
    %v461 = vmul.f32 %v429, %v460
    %v462 = vrcp.pop %v228
    %v463 = vmul.f32 %v431, %v462
    %v464 = vrcp.pop %v229
    %v465 = vmul.f32 %v433, %v464
    %v466 = vrcp.pop %v230
    %v467 = vmul.f32 %v435, %v466
    %v468 = vrcp.pop %v231
    %v469 = vmul.f32 %v437, %v468
    %v470 = vrcp.pop %v232
    %v471 = vmul.f32 %v439, %v470
    %v472 = vrcp.pop %v233
    %v473 = vmul.f32 %v441, %v472
    %475 = vset.pattern.permute.xlu0 0
    %476 = vperm.xlu0 %475, %v443
    %v477 = vpop.permute.xlu0 %476
    %480 = vset.pattern.permute.xlu0 0
    %481 = vperm.xlu0 %480, %v445
    %v482 = vpop.permute.xlu0 %481
    %485 = vset.pattern.permute.xlu0 0
    %486 = vperm.xlu0 %485, %v447
    %v487 = vpop.permute.xlu0 %486
    %490 = vset.pattern.permute.xlu0 0
    %491 = vperm.xlu0 %490, %v449
    %v492 = vpop.permute.xlu0 %491
    %495 = vset.pattern.permute.xlu0 0
    %496 = vperm.xlu0 %495, %v451
    %v497 = vpop.permute.xlu0 %496
    %500 = vset.pattern.permute.xlu0 0
    %501 = vperm.xlu0 %500, %v453
    %v502 = vpop.permute.xlu0 %501
    %505 = vset.pattern.permute.xlu0 0
    %506 = vperm.xlu0 %505, %v455
    %v507 = vpop.permute.xlu0 %506
    %510 = vset.pattern.permute.xlu0 0
    %511 = vperm.xlu0 %510, %v457
    %v512 = vpop.permute.xlu0 %511
    %515 = vset.pattern.permute.xlu0 0
    %516 = vperm.xlu0 %515, %v459
    %v517 = vpop.permute.xlu0 %516
    %520 = vset.pattern.permute.xlu0 0
    %521 = vperm.xlu0 %520, %v461
    %v522 = vpop.permute.xlu0 %521
    %525 = vset.pattern.permute.xlu0 0
    %526 = vperm.xlu0 %525, %v463
    %v527 = vpop.permute.xlu0 %526
    %530 = vset.pattern.permute.xlu0 0
    %531 = vperm.xlu0 %530, %v465
    %v532 = vpop.permute.xlu0 %531
    %535 = vset.pattern.permute.xlu0 0
    %536 = vperm.xlu0 %535, %v467
    %v537 = vpop.permute.xlu0 %536
    %540 = vset.pattern.permute.xlu0 0
    %541 = vperm.xlu0 %540, %v469
    %v542 = vpop.permute.xlu0 %541
    %545 = vset.pattern.permute.xlu0 0
    %546 = vperm.xlu0 %545, %v471
    %v547 = vpop.permute.xlu0 %546
    %550 = vset.pattern.permute.xlu0 0
    %551 = vperm.xlu0 %550, %v473
    %v552 = vpop.permute.xlu0 %551
    %v554 = vmul.f32 %v477, %v42
    %v555 = vmul.f32 %v482, %v43
    %v556 = vmul.f32 %v487, %v44
    %v557 = vmul.f32 %v492, %v45
    %v558 = vmul.f32 %v497, %v46
    %v559 = vmul.f32 %v502, %v47
    %v560 = vmul.f32 %v507, %v48
    %v561 = vmul.f32 %v512, %v49
    %v562 = vmul.f32 %v517, %v50
    %v563 = vmul.f32 %v522, %v51
    %v564 = vmul.f32 %v527, %v52
    %v565 = vmul.f32 %v532, %v53
    %v566 = vmul.f32 %v537, %v54
    %v567 = vmul.f32 %v542, %v55
    %v568 = vmul.f32 %v547, %v56
    %v569 = vmul.f32 %v552, %v57
    %v570 = vpack.c.bf16 %v555, %v554
    %v571 = vpack.c.bf16 %v557, %v556
    %v572 = vpack.c.bf16 %v559, %v558
    %v573 = vpack.c.bf16 %v561, %v560
    %v574 = vpack.c.bf16 %v563, %v562
    %v575 = vpack.c.bf16 %v565, %v564
    %v576 = vpack.c.bf16 %v567, %v566
    %v577 = vpack.c.bf16 %v569, %v568
    %v586 = vunpack.c.l.b16 %v570
    %v587 = vunpack.c.h.b16 %v570
    %v588 = vunpack.c.l.b16 %v571
    %v589 = vunpack.c.h.b16 %v571
    %v590 = vunpack.c.l.b16 %v572
    %v591 = vunpack.c.h.b16 %v572
    %v592 = vunpack.c.l.b16 %v573
    %v593 = vunpack.c.h.b16 %v573
    %v594 = vunpack.c.l.b16 %v574
    %v595 = vunpack.c.h.b16 %v574
    %v596 = vunpack.c.l.b16 %v575
    %v597 = vunpack.c.h.b16 %v575
    %v598 = vunpack.c.l.b16 %v576
    %v599 = vunpack.c.h.b16 %v576
    %v600 = vunpack.c.l.b16 %v577
    %v601 = vunpack.c.h.b16 %v577
    %v602 = vpack.c.b16 %v586, %v586
    %v603 = vpack.c.b16 %v587, %v587
    %v604 = vpack.c.b16 %v588, %v588
    %v605 = vpack.c.b16 %v589, %v589
    %v606 = vpack.c.b16 %v590, %v590
    %v607 = vpack.c.b16 %v591, %v591
    %v608 = vpack.c.b16 %v592, %v592
    %v609 = vpack.c.b16 %v593, %v593
    %v610 = vpack.c.b16 %v594, %v594
    %v611 = vpack.c.b16 %v595, %v595
    %v612 = vpack.c.b16 %v596, %v596
    %v613 = vpack.c.b16 %v597, %v597
    %v614 = vpack.c.b16 %v598, %v598
    %v615 = vpack.c.b16 %v599, %v599
    %v616 = vpack.c.b16 %v600, %v600
    %v617 = vpack.c.b16 %v601, %v601
    %634 = vst [vmem:[#allocation5] sm:$0xf] %v602
    %635 = vst [vmem:[#allocation5 + $0x4] sm:$0xf] %v603
    %636 = vst [vmem:[#allocation5 + $0x8] sm:$0xf] %v604
    %637 = vst [vmem:[#allocation5 + $0xc] sm:$0xf] %v605
    %638 = vst [vmem:[#allocation5 + $0x10] sm:$0xf] %v606
    %639 = vst [vmem:[#allocation5 + $0x14] sm:$0xf] %v607
    %640 = vst [vmem:[#allocation5 + $0x18] sm:$0xf] %v608
    %641 = vst [vmem:[#allocation5 + $0x1c] sm:$0xf] %v609
    %642 = vst [vmem:[#allocation5 + $0x20] sm:$0xf] %v610
    %643 = vst [vmem:[#allocation5 + $0x24] sm:$0xf] %v611
    %644 = vst [vmem:[#allocation5 + $0x28] sm:$0xf] %v612
    %645 = vst [vmem:[#allocation5 + $0x2c] sm:$0xf] %v613
    %646 = vst [vmem:[#allocation5 + $0x30] sm:$0xf] %v614
    %647 = vst [vmem:[#allocation5 + $0x34] sm:$0xf] %v615
    %648 = vst [vmem:[#allocation5 + $0x38] sm:$0xf] %v616
    %649 = vst [vmem:[#allocation5 + $0x3c] sm:$0xf] %v617
    // Predicated region
    $region10: #{tpu_custom_call.1} parent=1 // pred_check
      _
    $region11: #{tpu_custom_call.1} parent=1 // pred_check_branch
      %651 = sbr.rel (0) target = $region13
    $region12: #{tpu_custom_call.1} parent=1 // pred_region
      %s653 = ssub.s32 1024, 1024
      %654 = vsyncadd [#allocation4], %s653
      %s655 = sshll.u32 [#allocation5], 4
      %s656 = int_to_ptr.vmem [resolvable:$true] %s655
      %661 = dma.vmem_to_hbm [thread:$0]  %s656, 1024, %s1, [#allocation4], 64, 64, 4
    $region13: #{tpu_custom_call.1} parent=1 // pred_fallthru
      _
    // Predicated region
    $region14: #{tpu_custom_call.1} parent=1 // pred_check
      _
    $region15: #{tpu_custom_call.1} parent=1 // pred_check_branch
      %663 = sbr.rel (0) target = $region17
    $region16: #{tpu_custom_call.1} parent=1 // pred_region
      %664 = dma.done [#allocation4], 1024
    $region17: #{tpu_custom_call.1} parent=1 // pred_fallthru
      _
    %665 = vsyncpa [#allocation3], 1
    %666 = vsyncpa [#allocation4], 1

</llo_original>
